<compile_context>
chip_gen: v5e
topology: v5e:2x2
jax: 0.10.0
libtpu: 0.0.40
codegen_flags: <defaults>
</compile_context>

<pallas_src>
import jax
import jax.numpy as jnp
from jax.experimental import pallas as pl
from jax.experimental.pallas import tpu as pltpu


def skip_connection_kernel(x_ref, w1_ref, b1_ref, w2y_ref, w2s_ref, b2_ref, o_ref):
    # x_ref: (C, T) -- channels on sublanes, pixels lane-dense.
    x = x_ref[...]
    # module_1: 1x1 conv == per-pixel channel matmul; bias + ReLU epilogue in f32.
    y1 = jnp.dot(w1_ref[...], x, preferred_element_type=jnp.float32)
    y1 = jnp.maximum(y1 + b1_ref[...], 0.0)
    # module_2 on cat([module_1(x), skip], channel) == W2_y @ y1 + W2_skip @ x + b2.
    y2 = jnp.dot(w2y_ref[...], y1.astype(w2y_ref.dtype),
                 preferred_element_type=jnp.float32)
    y2 = y2 + jnp.dot(w2s_ref[...], x, preferred_element_type=jnp.float32)
    y2 = y2 + b2_ref[...]
    o_ref[...] = y2.astype(o_ref.dtype)


def _choose_hw_tile(C, HW, itemsize,
                    tile_vmem_budget=12 * 1024 * 1024,
                    target_step_bytes=2 * 1024 * 1024):
    """Fat, lane-dense spatial tile, scaled with C and the VMEM budget."""
    c_rows = ((C + 7) // 8) * 8                   # sublane-rounded VMEM rows (f32)
    bytes_per_lane = 2 * 2 * c_rows * itemsize    # x + out, double-buffered
    vmem_max = max(128, tile_vmem_budget // bytes_per_lane)
    want = max(128, target_step_bytes // (2 * C * itemsize))   # >= ~1-2 MiB/step
    tile = min(want, vmem_max)
    tile = max(128, (tile // 128) * 128)
    if tile >= HW:
        return HW                                 # whole spatial extent per step
    # Prefer a tile that divides HW so every block is full (no ragged tail).
    for t in range(tile, 127, -128):
        if HW % t == 0:
            return t
    return tile   # ragged last block: Pallas masks the out-of-bounds writeback


def skip_connection_forward(x_nchw, w1, b1, w2_y, w2_skip, b2, *, hw_tile=None):
    """x_nchw: (N, C, H, W); w1/w2_y/w2_skip: (C, C); b1/b2: (C, 1)."""
    N, C, H, W = x_nchw.shape
    HW = H * W
    itemsize = jnp.dtype(x_nchw.dtype).itemsize
    if hw_tile is None:
        hw_tile = _choose_hw_tile(C, HW, itemsize)

    x_rows = x_nchw.reshape(N, C, HW)             # metadata-only reshape, no HBM pass
    grid = (N, pl.cdiv(HW, hw_tile))

    # Grid-invariant operands: fully VMEM-resident, not blocked / double-buffered.
    resident = pl.BlockSpec(memory_space=pltpu.MemorySpace.VMEM)

    out_rows = pl.pallas_call(
        skip_connection_kernel,
        out_shape=jax.ShapeDtypeStruct((N, C, HW), x_nchw.dtype),
        grid_spec=pltpu.PrefetchScalarGridSpec(
            num_scalar_prefetch=0,
            grid=grid,
            in_specs=[
                pl.BlockSpec((None, C, hw_tile), lambda n, t: (n, 0, t)),  # x tile
                resident,   # W1      (C, C)
                resident,   # b1      (C, 1)
                resident,   # W2_y    (C, C)
                resident,   # W2_skip (C, C)
                resident,   # b2      (C, 1)
            ],
            out_specs=pl.BlockSpec((None, C, hw_tile), lambda n, t: (n, 0, t)),
        ),
        compiler_params=pltpu.CompilerParams(
            dimension_semantics=("parallel", "parallel"),
            vmem_limit_bytes=32 * 1024 * 1024,
        ),
    )(x_rows, w1, b1, w2_y, w2_skip, b2)

    return out_rows.reshape(N, C, H, W)


def reference_forward(x_nchw, w1, b1, w2_y, w2_skip, b2):
    """Plain-JAX mirror of the PyTorch forward (channels-first, concat on dim 1)."""
    N, C, H, W = x_nchw.shape
    xr = x_nchw.reshape(N, C, H * W).astype(jnp.float32)
    y1 = jnp.maximum(jnp.einsum("oc,nct->not", w1.astype(jnp.float32), xr)
                     + b1[None].astype(jnp.float32), 0.0)
    y2 = (jnp.einsum("oc,nct->not", w2_y.astype(jnp.float32), y1)
          + jnp.einsum("oc,nct->not", w2_skip.astype(jnp.float32), xr)
          + b2[None].astype(jnp.float32))
    return y2.reshape(N, C, H, W).astype(x_nchw.dtype)


if __name__ == "__main__":
    N, C, H, W = 2, 4, 16, 16   # HW = 256 lanes per sample

    key = jax.random.PRNGKey(0)
    kx, k1, kb1, k2, kb2 = jax.random.split(key, 5)

    x = jax.random.normal(kx, (N, C, H, W), dtype=jnp.float32)

    # Conv2d(.., kernel_size=1) weights stored as (C_out, C_in) matrices.
    w1 = jax.random.normal(k1, (C, C), dtype=jnp.float32) * 0.1
    b1 = jax.random.normal(kb1, (C, 1), dtype=jnp.float32) * 0.1
    w2 = jax.random.normal(k2, (C, 2 * C), dtype=jnp.float32) * 0.1
    b2 = jax.random.normal(kb2, (C, 1), dtype=jnp.float32) * 0.1

    # torch.cat([module_1(x), skip], dim=1): the first C input channels of
    # module_2 see module_1's output, the last C see the skip.
    w2_y = w2[:, :C]
    w2_skip = w2[:, C:]

    out = skip_connection_forward(x, w1, b1, w2_y, w2_skip, b2)
    out = jax.block_until_ready(out)

    ref = reference_forward(x, w1, b1, w2_y, w2_skip, b2)
    assert out.shape == (N, C, H, W)
    assert jnp.allclose(out, ref, atol=1e-5, rtol=1e-5)

    print("KERNEL_OK")
</pallas_src>

<mosaic_0001>
module attributes {stable_mosaic.version = 11 : i64} {
  func.func @skip_connection_kernel(%arg0: i32, %arg1: i32, %arg2: memref<1x4x256xf32, #tpu.memory_space<vmem>>, %arg3: memref<4x4xf32, #tpu.memory_space<vmem>>, %arg4: memref<4x1xf32, #tpu.memory_space<vmem>>, %arg5: memref<4x4xf32, #tpu.memory_space<vmem>>, %arg6: memref<4x4xf32, #tpu.memory_space<vmem>>, %arg7: memref<4x1xf32, #tpu.memory_space<vmem>>, %arg8: memref<1x4x256xf32, #tpu.memory_space<vmem>>) attributes {dimension_semantics = [#tpu.dimension_semantics<parallel>, #tpu.dimension_semantics<parallel>], iteration_bounds = array<i64: 2, 1>, scalar_prefetch = 0 : i64, scratch_operands = 0 : i64, tpu.core_type = #tpu.core_type<tc>, window_params = [{transform_indices = @transform_0, window_bounds = array<i64: 1, 4, 256>}, {pipeline_mode = #tpu.pipeline_mode<synchronous>, transform_indices = @transform_1, window_bounds = array<i64: 4, 4>}, {pipeline_mode = #tpu.pipeline_mode<synchronous>, transform_indices = @transform_2, window_bounds = array<i64: 4, 1>}, {pipeline_mode = #tpu.pipeline_mode<synchronous>, transform_indices = @transform_3, window_bounds = array<i64: 4, 4>}, {pipeline_mode = #tpu.pipeline_mode<synchronous>, transform_indices = @transform_4, window_bounds = array<i64: 4, 4>}, {pipeline_mode = #tpu.pipeline_mode<synchronous>, transform_indices = @transform_5, window_bounds = array<i64: 4, 1>}, {transform_indices = @transform_6, window_bounds = array<i64: 1, 4, 256>}]} {
    %c0 = arith.constant 0 : index
    %c0_0 = arith.constant 0 : index
    %c0_1 = arith.constant 0 : index
    %0 = vector.load %arg2[%c0, %c0_0, %c0_1] : memref<1x4x256xf32, #tpu.memory_space<vmem>>, vector<1x4x256xf32>
    %1 = vector.shape_cast %0 : vector<1x4x256xf32> to vector<4x256xf32>
    %c0_2 = arith.constant 0 : index
    %c0_3 = arith.constant 0 : index
    %2 = vector.load %arg3[%c0_2, %c0_3] : memref<4x4xf32, #tpu.memory_space<vmem>>, vector<4x4xf32>
    %cst = arith.constant dense<0.000000e+00> : vector<4x256xf32>
    %3 = tpu.matmul %2, %1, %cst {dimension_numbers = #tpu.dot_dimension_numbers<[1], [0], [0], [1], [0, 0, 1, 1], [], []>} : vector<4x4xf32>, vector<4x256xf32>, vector<4x256xf32> -> vector<4x256xf32>
    %c0_4 = arith.constant 0 : index
    %c0_5 = arith.constant 0 : index
    %4 = vector.load %arg4[%c0_4, %c0_5] : memref<4x1xf32, #tpu.memory_space<vmem>>, vector<4x1xf32>
    %5 = vector.broadcast %4 : vector<4x1xf32> to vector<4x256xf32>
    %6 = arith.addf %3, %5 : vector<4x256xf32>
    %cst_6 = arith.constant 0.000000e+00 : f32
    %7 = vector.broadcast %cst_6 : f32 to vector<4x256xf32>
    %8 = arith.maximumf %6, %7 : vector<4x256xf32>
    %c0_7 = arith.constant 0 : index
    %c0_8 = arith.constant 0 : index
    %9 = vector.load %arg5[%c0_7, %c0_8] : memref<4x4xf32, #tpu.memory_space<vmem>>, vector<4x4xf32>
    %cst_9 = arith.constant dense<0.000000e+00> : vector<4x256xf32>
    %10 = tpu.matmul %9, %8, %cst_9 {dimension_numbers = #tpu.dot_dimension_numbers<[1], [0], [0], [1], [0, 0, 1, 1], [], []>} : vector<4x4xf32>, vector<4x256xf32>, vector<4x256xf32> -> vector<4x256xf32>
    %c0_10 = arith.constant 0 : index
    %c0_11 = arith.constant 0 : index
    %11 = vector.load %arg6[%c0_10, %c0_11] : memref<4x4xf32, #tpu.memory_space<vmem>>, vector<4x4xf32>
    %cst_12 = arith.constant dense<0.000000e+00> : vector<4x256xf32>
    %12 = tpu.matmul %11, %1, %cst_12 {dimension_numbers = #tpu.dot_dimension_numbers<[1], [0], [0], [1], [0, 0, 1, 1], [], []>} : vector<4x4xf32>, vector<4x256xf32>, vector<4x256xf32> -> vector<4x256xf32>
    %13 = arith.addf %10, %12 : vector<4x256xf32>
    %c0_13 = arith.constant 0 : index
    %c0_14 = arith.constant 0 : index
    %14 = vector.load %arg7[%c0_13, %c0_14] : memref<4x1xf32, #tpu.memory_space<vmem>>, vector<4x1xf32>
    %15 = vector.broadcast %14 : vector<4x1xf32> to vector<4x256xf32>
    %16 = arith.addf %13, %15 : vector<4x256xf32>
    %c0_15 = arith.constant 0 : index
    %c0_16 = arith.constant 0 : index
    %c0_17 = arith.constant 0 : index
    %17 = vector.load %arg8[%c0_15, %c0_16, %c0_17] : memref<1x4x256xf32, #tpu.memory_space<vmem>>, vector<1x4x256xf32>
    %18 = vector.shape_cast %17 : vector<1x4x256xf32> to vector<4x256xf32>
    %19 = vector.shape_cast %16 : vector<4x256xf32> to vector<1x4x256xf32>
    tpu.vector_store %arg8[%c0_15, %c0_16, %c0_17], %19 {strides = array<i32>} : memref<1x4x256xf32, #tpu.memory_space<vmem>>, vector<1x4x256xf32>,
    return
  }
  func.func @transform_0(%arg0: i32, %arg1: i32) -> (i32, i32, i32) {
    %c0_i32 = arith.constant 0 : i32
    %c0_i32_0 = arith.constant 0 : i32
    return %arg0, %c0_i32, %arg1 : i32, i32, i32
  }
  func.func @transform_1(%arg0: i32, %arg1: i32) -> (i32, i32) {
    %c0_i32 = arith.constant 0 : i32
    %c0_i32_0 = arith.constant 0 : i32
    %c0_i32_1 = arith.constant 0 : i32
    return %c0_i32, %c0_i32_0 : i32, i32
  }
  func.func @transform_2(%arg0: i32, %arg1: i32) -> (i32, i32) {
    %c0_i32 = arith.constant 0 : i32
    %c0_i32_0 = arith.constant 0 : i32
    %c0_i32_1 = arith.constant 0 : i32
    return %c0_i32, %c0_i32_0 : i32, i32
  }
  func.func @transform_3(%arg0: i32, %arg1: i32) -> (i32, i32) {
    %c0_i32 = arith.constant 0 : i32
    %c0_i32_0 = arith.constant 0 : i32
    %c0_i32_1 = arith.constant 0 : i32
    return %c0_i32, %c0_i32_0 : i32, i32
  }
  func.func @transform_4(%arg0: i32, %arg1: i32) -> (i32, i32) {
    %c0_i32 = arith.constant 0 : i32
    %c0_i32_0 = arith.constant 0 : i32
    %c0_i32_1 = arith.constant 0 : i32
    return %c0_i32, %c0_i32_0 : i32, i32
  }
  func.func @transform_5(%arg0: i32, %arg1: i32) -> (i32, i32) {
    %c0_i32 = arith.constant 0 : i32
    %c0_i32_0 = arith.constant 0 : i32
    %c0_i32_1 = arith.constant 0 : i32
    return %c0_i32, %c0_i32_0 : i32, i32
  }
  func.func @transform_6(%arg0: i32, %arg1: i32) -> (i32, i32, i32) {
    %c0_i32 = arith.constant 0 : i32
    %c0_i32_0 = arith.constant 0 : i32
    return %arg0, %c0_i32, %arg1 : i32, i32, i32
  }
}

</mosaic_0001>

<llo_original>
// kernel: tpu_custom_call.1
$region0: #{tpu_custom_call.1}
  #allocation0 [shape = 'u32[]', space=smem, size = 0x4, offset = 0x4, fixed_abs, tag = 'smem constant byte address 0x4 - core index']
  #allocation1 [shape = 'u32[72,128]{1,0:T(1,128)}', space=vmem, size = 0x9000, scoped, tag = 'internal scratch']
  %s0 = inlined_call_operand.hbm [shape: f32[2,4,256], index: 0, kind: input, shape index: {}]
  %s1 = inlined_call_operand.vmem [shape: f32[4,4], index: 1, kind: input, shape index: {}]
  %s2 = inlined_call_operand.vmem [shape: f32[4,1], index: 2, kind: input, shape index: {}]
  %s3 = inlined_call_operand.vmem [shape: f32[4,4], index: 3, kind: input, shape index: {}]
  %s4 = inlined_call_operand.hbm [shape: f32[4,4], index: 4, kind: input, shape index: {}]
  %s5 = inlined_call_operand.vmem [shape: f32[4,1], index: 5, kind: input, shape index: {}]
  %s6 = inlined_call_operand.hbm [shape: f32[2,4,256], index: 6, kind: output, shape index: {}]
  %s7 = sld [smem:[#allocation0]]
  $region65: #{tpu_custom_call.1} parent=0
    _
  %s9 = ssub.s32 1, %s7
  %s10 = scalar_select 0, %s9, %s7
  $region1: #{tpu_custom_call.1} parent=0
    #allocation2 [shape = 'u8[8192]{0}', space=vmem, size = 0x2000, scoped, tag = 'input window, operand 0']
    #allocation3 [shape = 's32[2]{0}', space=sflag, size = 0x8, scoped, tag = 'scoped memory for tpu_custom_call.1']
    #allocation4 [shape = 's32[2]{0}', space=sflag, size = 0x8, scoped, tag = 'scoped memory for tpu_custom_call.1']
    #allocation5 [shape = 'u8[2048]{0}', space=vmem, size = 0x800, scoped, tag = 'input window, operand 4, single buffered']
    #allocation6 [shape = 's32[1]{0}', space=sflag, size = 0x4, scoped, tag = 'scoped memory for tpu_custom_call.1']
    #allocation7 [shape = 'u8[8192]{0}', space=vmem, size = 0x2000, scoped, tag = 'output window, operand 0']
    %11 = vsyncpa [#allocation3], 0
    %s12 = scalar_lea.sflag [#allocation3], 1
    %13 = vsyncpa %s12, 0
    %14 = vsyncpa [#allocation6], 0
    %15 = vsyncpa [#allocation4], 0
    %s16 = scalar_lea.sflag [#allocation4], 1
    %17 = vsyncpa %s16, 0
    loop: start=0, step=1, limit=4
    $region2: #{tpu_custom_call.1} parent=1 // loop_pre_header
      _
    $region3: #{tpu_custom_call.1} parent=1 // loop_header
      %s19 = sphi 0, %s23
      %p20 = scmp.ge.s32.totalorder %s19, 4
      %s26 = sphi 0, %s38
      %s27 = sphi 0, %s34
      %s28 = sphi 0, %s26
      %s29 = sphi 0, %s27
      %s30 = sphi 0, %s28
      %s31 = sphi 0, %s29
      %s43 = sphi 0, %s45
      %s46 = sphi 0, %s43
      %s47 = sphi 0, %s46
      %s63 = sphi 0, %s47
      %s67 = sphi 0, %s67
      %s69 = sphi 0, %s67
      %s70 = sphi 0, %s69
      %s84 = sphi 0, %s70
      %s88 = sphi 0, %s88
      %s90 = sphi 0, %s88
      %s91 = sphi 0, %s90
      %s105 = sphi 0, %s91
      %s109 = sphi 0, %s109
      %s111 = sphi 0, %s109
      %s112 = sphi 0, %s111
      %s126 = sphi 0, %s112
      %s130 = sphi 0, %s130
      %s132 = sphi 0, %s130
      %s133 = sphi 0, %s132
      %s147 = sphi 0, %s133
      %s151 = sphi 0, %s151
      %s153 = sphi 0, %s151
      %s154 = sphi 0, %s153
      %s168 = sphi 0, %s154
      %s176 = sphi 0, %s178
      %s179 = sphi 0, %s176
      %s180 = sphi 0, %s179
      %s196 = sphi 0, %s180
    $region4: #{tpu_custom_call.1} parent=1 // loop_header_branch
      %22 = sbr.rel (%p20) target = $region8
    $region5: #{tpu_custom_call.1} parent=1 // loop_body
      %s24 = ssub.s32 %s19, 1
      %s25 = ssub.s32 %s19, 2
      %s32 = sadd.s32 1, %s27
      %p33 = scmp.ge.s32.totalorder %s32, 1
      %s34 = scalar_select %p33, 0, %s32
      %s35 = sadd.s32 1, %s26
      %s36 = scalar_select %p33, %s35, %s26
      %p37 = scmp.ge.s32.totalorder %s36, 2
      %s38 = scalar_select %p37, 0, %s36
      %s39 = ssub.s32 %s26, %s38
      %s40 = ssub.s32 %s27, %s34
      %s41 = sor.u32 %s39, %s40
      %p42 = scmp.eq.s32.totalorder %s41, 0
      %s44 = sadd.s32 %s43, 1
      %s45 = scalar_select %p42, %s43, %s44
      %p48 = pneg %p42
      %p49 = scmp.eq.s32.totalorder %s19, 1
      %p50 = por %p48, %p49
      %p51 = scmp.ne.s32.totalorder %s43, %s46
      %p52 = scmp.eq.s32.totalorder %s19, 0
      %p53 = por %p51, %p52
      %p54 = scmp.ne.s32.totalorder %s43, %s46
      %p55 = scmp.eq.s32.totalorder %s24, 1
      %p56 = por %p54, %p55
      %p57 = scmp.ne.s32.totalorder %s46, %s47
      %p58 = scmp.eq.s32.totalorder %s24, 0
      %p59 = por %p57, %p58
      %p60 = scmp.ne.s32.totalorder %s46, %s47
      %p61 = scmp.eq.s32.totalorder %s25, 1
      %p62 = por %p60, %p61
      %p64 = scmp.ne.s32.totalorder %s47, %s63
      %p65 = scmp.eq.s32.totalorder %s25, 0
      %p66 = por %p64, %p65
      %s68 = sadd.s32 %s67, 1
      %p71 = scmp.eq.s32.totalorder %s19, 1
      %p72 = scmp.ne.s32.totalorder %s67, %s69
      %p73 = scmp.eq.s32.totalorder %s19, 0
      %p74 = por %p72, %p73
      %p75 = scmp.ne.s32.totalorder %s67, %s69
      %p76 = scmp.eq.s32.totalorder %s24, 1
      %p77 = por %p75, %p76
      %p78 = scmp.ne.s32.totalorder %s69, %s70
      %p79 = scmp.eq.s32.totalorder %s24, 0
      %p80 = por %p78, %p79
      %p81 = scmp.ne.s32.totalorder %s69, %s70
      %p82 = scmp.eq.s32.totalorder %s25, 1
      %p83 = por %p81, %p82
      %p85 = scmp.ne.s32.totalorder %s70, %s84
      %p86 = scmp.eq.s32.totalorder %s25, 0
      %p87 = por %p85, %p86
      %s89 = sadd.s32 %s88, 1
      %p92 = scmp.eq.s32.totalorder %s19, 1
      %p93 = scmp.ne.s32.totalorder %s88, %s90
      %p94 = scmp.eq.s32.totalorder %s19, 0
      %p95 = por %p93, %p94
      %p96 = scmp.ne.s32.totalorder %s88, %s90
      %p97 = scmp.eq.s32.totalorder %s24, 1
      %p98 = por %p96, %p97
      %p99 = scmp.ne.s32.totalorder %s90, %s91
      %p100 = scmp.eq.s32.totalorder %s24, 0
      %p101 = por %p99, %p100
      %p102 = scmp.ne.s32.totalorder %s90, %s91
      %p103 = scmp.eq.s32.totalorder %s25, 1
      %p104 = por %p102, %p103
      %p106 = scmp.ne.s32.totalorder %s91, %s105
      %p107 = scmp.eq.s32.totalorder %s25, 0
      %p108 = por %p106, %p107
      %s110 = sadd.s32 %s109, 1
      %p113 = scmp.eq.s32.totalorder %s19, 1
      %p114 = scmp.ne.s32.totalorder %s109, %s111
      %p115 = scmp.eq.s32.totalorder %s19, 0
      %p116 = por %p114, %p115
      %p117 = scmp.ne.s32.totalorder %s109, %s111
      %p118 = scmp.eq.s32.totalorder %s24, 1
      %p119 = por %p117, %p118
      %p120 = scmp.ne.s32.totalorder %s111, %s112
      %p121 = scmp.eq.s32.totalorder %s24, 0
      %p122 = por %p120, %p121
      %p123 = scmp.ne.s32.totalorder %s111, %s112
      %p124 = scmp.eq.s32.totalorder %s25, 1
      %p125 = por %p123, %p124
      %p127 = scmp.ne.s32.totalorder %s112, %s126
      %p128 = scmp.eq.s32.totalorder %s25, 0
      %p129 = por %p127, %p128
      %s131 = sadd.s32 %s130, 1
      %p134 = scmp.eq.s32.totalorder %s19, 1
      %p135 = scmp.ne.s32.totalorder %s130, %s132
      %p136 = scmp.eq.s32.totalorder %s19, 0
      %p137 = por %p135, %p136
      %p138 = scmp.ne.s32.totalorder %s130, %s132
      %p139 = scmp.eq.s32.totalorder %s24, 1
      %p140 = por %p138, %p139
      %p141 = scmp.ne.s32.totalorder %s132, %s133
      %p142 = scmp.eq.s32.totalorder %s24, 0
      %p143 = por %p141, %p142
      %p144 = scmp.ne.s32.totalorder %s132, %s133
      %p145 = scmp.eq.s32.totalorder %s25, 1
      %p146 = por %p144, %p145
      %p148 = scmp.ne.s32.totalorder %s133, %s147
      %p149 = scmp.eq.s32.totalorder %s25, 0
      %p150 = por %p148, %p149
      %s152 = sadd.s32 %s151, 1
      %p155 = scmp.eq.s32.totalorder %s19, 1
      %p156 = scmp.ne.s32.totalorder %s151, %s153
      %p157 = scmp.eq.s32.totalorder %s19, 0
      %p158 = por %p156, %p157
      %p159 = scmp.ne.s32.totalorder %s151, %s153
      %p160 = scmp.eq.s32.totalorder %s24, 1
      %p161 = por %p159, %p160
      %p162 = scmp.ne.s32.totalorder %s153, %s154
      %p163 = scmp.eq.s32.totalorder %s24, 0
      %p164 = por %p162, %p163
      %p165 = scmp.ne.s32.totalorder %s153, %s154
      %p166 = scmp.eq.s32.totalorder %s25, 1
      %p167 = por %p165, %p166
      %p169 = scmp.ne.s32.totalorder %s154, %s168
      %p170 = scmp.eq.s32.totalorder %s25, 0
      %p171 = por %p169, %p170
      %s172 = ssub.s32 %s26, %s38
      %s173 = ssub.s32 %s27, %s34
      %s174 = sor.u32 %s172, %s173
      %p175 = scmp.eq.s32.totalorder %s174, 0
      %s177 = sadd.s32 %s176, 1
      %s178 = scalar_select %p175, %s176, %s177
      %p181 = pneg %p175
      %p182 = scmp.eq.s32.totalorder %s19, 1
      %p183 = por %p181, %p182
      %p184 = scmp.ne.s32.totalorder %s176, %s179
      %p185 = scmp.eq.s32.totalorder %s19, 0
      %p186 = por %p184, %p185
      %p187 = scmp.ne.s32.totalorder %s176, %s179
      %p188 = scmp.eq.s32.totalorder %s24, 1
      %p189 = por %p187, %p188
      %p190 = scmp.ne.s32.totalorder %s179, %s180
      %p191 = scmp.eq.s32.totalorder %s24, 0
      %p192 = por %p190, %p191
      %p193 = scmp.ne.s32.totalorder %s179, %s180
      %p194 = scmp.eq.s32.totalorder %s25, 1
      %p195 = por %p193, %p194
      %p197 = scmp.ne.s32.totalorder %s180, %s196
      %p198 = scmp.eq.s32.totalorder %s25, 0
      %p199 = por %p197, %p198
      %p200 = scmp.le.s32.totalorder 1, %s19
      %p201 = scmp.lt.s32.totalorder %s19, 3
      %p202 = pnand %p200, %p201
      %p203 = pneg %p202
      // Predicated region
      $region9: #{tpu_custom_call.1} parent=5 // pred_check
        _
      $region10: #{tpu_custom_call.1} parent=5 // pred_check_branch
        %205 = sbr.rel (%p202) target = $region12
      $region11: #{tpu_custom_call.1} parent=5 // pred_region
        %s206 = ssub.s32 %s19, 1
        // Predicated region
        $region13: #{tpu_custom_call.1} parent=11 // pred_check
          %p207 = pneg %p80
        $region14: #{tpu_custom_call.1} parent=11 // pred_check_branch
          %209 = sbr.rel (%p207) target = $region16
        $region15: #{tpu_custom_call.1} parent=11 // pred_region
          _
        $region16: #{tpu_custom_call.1} parent=11 // pred_fallthru
          _
        // Predicated region
        $region17: #{tpu_custom_call.1} parent=11 // pred_check
          %p210 = pneg %p101
        $region18: #{tpu_custom_call.1} parent=11 // pred_check_branch
          %212 = sbr.rel (%p210) target = $region20
        $region19: #{tpu_custom_call.1} parent=11 // pred_region
          _
        $region20: #{tpu_custom_call.1} parent=11 // pred_fallthru
          _
        // Predicated region
        $region21: #{tpu_custom_call.1} parent=11 // pred_check
          %p213 = pneg %p122
        $region22: #{tpu_custom_call.1} parent=11 // pred_check_branch
          %215 = sbr.rel (%p213) target = $region24
        $region23: #{tpu_custom_call.1} parent=11 // pred_region
          _
        $region24: #{tpu_custom_call.1} parent=11 // pred_fallthru
          _
        // Predicated region
        $region25: #{tpu_custom_call.1} parent=11 // pred_check
          %p216 = pneg %p143
        $region26: #{tpu_custom_call.1} parent=11 // pred_check_branch
          %218 = sbr.rel (%p216) target = $region28
        $region27: #{tpu_custom_call.1} parent=11 // pred_region
          %220 = vsyncadd [#allocation6], 0
          %s222 = sshll.u32 %s4, 4
          %s223 = int_to_ptr.hbm [resolvable:$true] %s222
          %s224 = sshll.u32 [#allocation5], 4
          %s225 = int_to_ptr.vmem [resolvable:$true] %s224
          %227 = dma.hbm_to_vmem [thread:$0]  %s223, 64, %s225, [#allocation6]
        $region28: #{tpu_custom_call.1} parent=11 // pred_fallthru
          _
        // Predicated region
        $region29: #{tpu_custom_call.1} parent=11 // pred_check
          %p228 = pneg %p164
        $region30: #{tpu_custom_call.1} parent=11 // pred_check_branch
          %230 = sbr.rel (%p228) target = $region32
        $region31: #{tpu_custom_call.1} parent=11 // pred_region
          _
        $region32: #{tpu_custom_call.1} parent=11 // pred_fallthru
          _
      $region12: #{tpu_custom_call.1} parent=5 // pred_fallthru
        _
      %p231 = scmp.lt.s32.totalorder %s19, 2
      // Predicated region
      $region33: #{tpu_custom_call.1} parent=5 // pred_check
        %p232 = pneg %p231
      $region34: #{tpu_custom_call.1} parent=5 // pred_check_branch
        %234 = sbr.rel (%p232) target = $region36
      $region35: #{tpu_custom_call.1} parent=5 // pred_region
        // Predicated region
        $region37: #{tpu_custom_call.1} parent=35 // pred_check
          %p235 = pneg %p53
        $region38: #{tpu_custom_call.1} parent=35 // pred_check_branch
          %237 = sbr.rel (%p235) target = $region40
        $region39: #{tpu_custom_call.1} parent=35 // pred_region
          %s238 = sand.u32 %s43, 1
          %s239 = scalar_lea.sflag [#allocation3], %s238
          %s240 = sand.u32 %s43, 1
          %s241 = smul.addr %s240, 8
          %s242 = scalar_lea.vmem [#allocation2], %s241
          %s243 = smul.u32 2, %s27
          %245 = vsyncadd %s239, 0
          %s246 = smul.addr %s26, 2
          %s247 = sadd.s32 %s243, %s246
          %s248 = smul.addr %s247, 4
          %s249 = scalar_lea.hbm %s0, %s248
          %s251 = sshll.u32 %s249, 4
          %s252 = int_to_ptr.hbm [resolvable:$true] %s251
          %s253 = sshll.u32 %s242, 4
          %s254 = int_to_ptr.vmem [resolvable:$true] %s253
          %256 = dma.hbm_to_vmem [thread:$0]  %s252, 128, %s254, %s239
        $region40: #{tpu_custom_call.1} parent=35 // pred_fallthru
          _
      $region36: #{tpu_custom_call.1} parent=5 // pred_fallthru
        _
      %p257 = scmp.le.s32.totalorder 1, %s19
      %p258 = scmp.lt.s32.totalorder %s19, 3
      %p259 = pnand %p257, %p258
      %p260 = pneg %p259
      // Predicated region
      $region41: #{tpu_custom_call.1} parent=5 // pred_check
        _
      $region42: #{tpu_custom_call.1} parent=5 // pred_check_branch
        %262 = sbr.rel (%p259) target = $region44
      $region43: #{tpu_custom_call.1} parent=5 // pred_region
        %s263 = ssub.s32 %s19, 1
        %s264 = sand.u32 %s46, 1
        %s265 = scalar_lea.sflag [#allocation3], %s264
        %s266 = sand.u32 %s46, 1
        %s267 = smul.addr %s266, 8
        %s268 = scalar_lea.vmem [#allocation2], %s267
        // Predicated region
        $region45: #{tpu_custom_call.1} parent=43 // pred_check
          %p269 = pneg %p59
        $region46: #{tpu_custom_call.1} parent=43 // pred_check_branch
          %271 = sbr.rel (%p269) target = $region48
        $region47: #{tpu_custom_call.1} parent=43 // pred_region
          %273 = dma.done %s265, 128
        $region48: #{tpu_custom_call.1} parent=43 // pred_fallthru
          _
        // Predicated region
        $region49: #{tpu_custom_call.1} parent=43 // pred_check
          %p274 = pneg %p143
        $region50: #{tpu_custom_call.1} parent=43 // pred_check_branch
          %276 = sbr.rel (%p274) target = $region52
        $region51: #{tpu_custom_call.1} parent=43 // pred_region
          %278 = dma.done [#allocation6], 64
        $region52: #{tpu_custom_call.1} parent=43 // pred_fallthru
          _
        %s279 = sand.u32 %s46, 1
        %s280 = scalar_lea.sflag [#allocation3], %s279
        %s281 = sand.u32 %s46, 1
        %s282 = smul.addr %s281, 8
        %s283 = scalar_lea.vmem [#allocation2], %s282
        %p284 = pneg %p59
        %p285 = pneg %p56
        %p286 = pneg %p80
        %p287 = pneg %p77
        %p288 = pneg %p101
        %p289 = pneg %p98
        %p290 = pneg %p122
        %p291 = pneg %p119
        %p292 = pneg %p143
        %p293 = pneg %p140
        %p294 = pneg %p164
        %p295 = pneg %p161
        %p296 = pneg %p192
        %p297 = pneg %p189
        %s298 = sand.u32 %s179, 1
        %s299 = scalar_lea.sflag [#allocation4], %s298
        %s300 = sand.u32 %s179, 1
        %s301 = smul.addr %s300, 8
        %s302 = scalar_lea.vmem [#allocation7], %s301
        %s303 = smul.u32 2, %s29
        %s304 = smul.u32 2, %s29
        %v305 = vld [vmem:[%s268] sm:$0xff]
        %v306 = vld [vmem:[%s1] sm:$0xf]
        %v307 = vld [vmem:[%s2] sm:$0xf]
        %309 = vset.pattern.permute.xlu0 0
        %310 = vperm.xlu0 %309, %v307
        %v311 = vpop.permute.xlu0 %310
        %314 = vst [vmem:[#allocation1] ss:$2 sm:$0xff] %v305
        %v315 = vld.sshfl [vmem:[#allocation1] sm:$0xff pattern:$0x75316420]
        %v316 = vld.sshfl [vmem:[#allocation1 + $0x8] sm:$0xff pattern:$0x75316420]
        %vm317 = vcmask 31744
        %v319 = vsel %vm317, %v306, 0
        %vm321 = vcmask 1043456
        %v322 = vsel %vm321, %v315, 0
        %v324 = vsel %vm321, %v316, 0
        %326 = vmatpush.msra.mxu0 0.0
        %327 = vmatpush.msra.mxu0 0.0
        %328 = vmatpush.msra.mxu0 0.0
        %329 = vmatpush.msra.mxu0 0.0
        %330 = vmatpush.msra.mxu0 0.0
        %331 = vmatpush.msra.mxu0 0.0
        %332 = vmatpush.msra.mxu0 0.0
        %333 = vmatpush.msra.mxu0 0.0
        %334 = vmatpush.msra.mxu0 0.0
        %335 = vmatpush.msra.mxu0 0.0
        %336 = vmatpush.msra.mxu0 0.0
        %337 = vmatpush.msra.mxu0 0.0
        %338 = vmatpush.msra.mxu0 0.0
        %339 = vmatpush.msra.mxu0 0.0
        %340 = vmatpush.msra.mxu0 0.0
        %341 = vmatpush.msra.mxu0 %v322
        %342 = vmatmul.f32.gmra.mxu0 %v319
        %v343 = vpop.f32.mrf.mxu0
        %v344 = vadd.f32 %v311, %v343
        %345 = vdwg.mxu0
        %346 = vmatpush.msra.mxu0 0.0
        %347 = vmatpush.msra.mxu0 0.0
        %348 = vmatpush.msra.mxu0 0.0
        %349 = vmatpush.msra.mxu0 0.0
        %350 = vmatpush.msra.mxu0 0.0
        %351 = vmatpush.msra.mxu0 0.0
        %352 = vmatpush.msra.mxu0 0.0
        %353 = vmatpush.msra.mxu0 0.0
        %354 = vmatpush.msra.mxu0 0.0
        %355 = vmatpush.msra.mxu0 0.0
        %356 = vmatpush.msra.mxu0 0.0
        %357 = vmatpush.msra.mxu0 0.0
        %358 = vmatpush.msra.mxu0 0.0
        %359 = vmatpush.msra.mxu0 0.0
        %360 = vmatpush.msra.mxu0 0.0
        %361 = vmatpush.msra.mxu0 %v324
        %362 = vmatmul.f32.gmra.mxu0 %v319
        %v363 = vpop.f32.mrf.mxu0
        %v364 = vadd.f32 %v311, %v363
        %365 = vdwg.mxu0
        %v366 = vmax.f32 %v344, 0.0
        %v367 = vmax.f32 %v364, 0.0
        %v368 = vld [vmem:[%s3] sm:$0xf]
        %v369 = vld [vmem:[#allocation5] sm:$0xf]
        %370 = vst [vmem:[#allocation1] ss:$2 sm:$0xff] %v305
        %v371 = vld.sshfl [vmem:[#allocation1] sm:$0xff pattern:$0x75316420]
        %v372 = vld.sshfl [vmem:[#allocation1 + $0x8] sm:$0xff pattern:$0x75316420]
        %v374 = vsel %vm317, %v369, 0
        %v376 = vsel %vm321, %v371, 0
        %v378 = vsel %vm321, %v372, 0
        %380 = vmatpush.msra.mxu0 0.0
        %381 = vmatpush.msra.mxu0 0.0
        %382 = vmatpush.msra.mxu0 0.0
        %383 = vmatpush.msra.mxu0 0.0
        %384 = vmatpush.msra.mxu0 0.0
        %385 = vmatpush.msra.mxu0 0.0
        %386 = vmatpush.msra.mxu0 0.0
        %387 = vmatpush.msra.mxu0 0.0
        %388 = vmatpush.msra.mxu0 0.0
        %389 = vmatpush.msra.mxu0 0.0
        %390 = vmatpush.msra.mxu0 0.0
        %391 = vmatpush.msra.mxu0 0.0
        %392 = vmatpush.msra.mxu0 0.0
        %393 = vmatpush.msra.mxu0 0.0
        %394 = vmatpush.msra.mxu0 0.0
        %395 = vmatpush.msra.mxu0 %v376
        %396 = vmatmul.f32.gmra.mxu0 %v374
        %v397 = vpop.f32.mrf.mxu0
        %v398 = vadd.f32 0.0, %v397
        %399 = vdwg.mxu0
        %400 = vmatpush.msra.mxu0 0.0
        %401 = vmatpush.msra.mxu0 0.0
        %402 = vmatpush.msra.mxu0 0.0
        %403 = vmatpush.msra.mxu0 0.0
        %404 = vmatpush.msra.mxu0 0.0
        %405 = vmatpush.msra.mxu0 0.0
        %406 = vmatpush.msra.mxu0 0.0
        %407 = vmatpush.msra.mxu0 0.0
        %408 = vmatpush.msra.mxu0 0.0
        %409 = vmatpush.msra.mxu0 0.0
        %410 = vmatpush.msra.mxu0 0.0
        %411 = vmatpush.msra.mxu0 0.0
        %412 = vmatpush.msra.mxu0 0.0
        %413 = vmatpush.msra.mxu0 0.0
        %414 = vmatpush.msra.mxu0 0.0
        %415 = vmatpush.msra.mxu0 %v378
        %416 = vmatmul.f32.gmra.mxu0 %v374
        %v417 = vpop.f32.mrf.mxu0
        %v418 = vadd.f32 0.0, %v417
        %419 = vdwg.mxu0
        %v421 = vsel %vm317, %v368, 0
        %v424 = vsel %vm321, %v366, 0
        %v427 = vsel %vm321, %v367, 0
        %429 = vmatpush.msra.mxu0 0.0
        %430 = vmatpush.msra.mxu0 0.0
        %431 = vmatpush.msra.mxu0 0.0
        %432 = vmatpush.msra.mxu0 0.0
        %433 = vmatpush.msra.mxu0 0.0
        %434 = vmatpush.msra.mxu0 0.0
        %435 = vmatpush.msra.mxu0 0.0
        %436 = vmatpush.msra.mxu0 0.0
        %437 = vmatpush.msra.mxu0 0.0
        %438 = vmatpush.msra.mxu0 0.0
        %439 = vmatpush.msra.mxu0 0.0
        %440 = vmatpush.msra.mxu0 0.0
        %441 = vmatpush.msra.mxu0 0.0
        %442 = vmatpush.msra.mxu0 0.0
        %443 = vmatpush.msra.mxu0 0.0
        %444 = vmatpush.msra.mxu0 %v424
        %445 = vmatmul.f32.gmra.mxu0 %v421
        %v446 = vpop.f32.mrf.mxu0
        %v447 = vadd.f32 %v398, %v446
        %448 = vdwg.mxu0
        %449 = vmatpush.msra.mxu0 0.0
        %450 = vmatpush.msra.mxu0 0.0
        %451 = vmatpush.msra.mxu0 0.0
        %452 = vmatpush.msra.mxu0 0.0
        %453 = vmatpush.msra.mxu0 0.0
        %454 = vmatpush.msra.mxu0 0.0
        %455 = vmatpush.msra.mxu0 0.0
        %456 = vmatpush.msra.mxu0 0.0
        %457 = vmatpush.msra.mxu0 0.0
        %458 = vmatpush.msra.mxu0 0.0
        %459 = vmatpush.msra.mxu0 0.0
        %460 = vmatpush.msra.mxu0 0.0
        %461 = vmatpush.msra.mxu0 0.0
        %462 = vmatpush.msra.mxu0 0.0
        %463 = vmatpush.msra.mxu0 0.0
        %464 = vmatpush.msra.mxu0 %v427
        %465 = vmatmul.f32.gmra.mxu0 %v421
        %v466 = vpop.f32.mrf.mxu0
        %v467 = vadd.f32 %v418, %v466
        %468 = vdwg.mxu0
        %v469 = vld [vmem:[%s5] sm:$0xf]
        %471 = vset.pattern.permute.xlu0 0
        %472 = vperm.xlu0 %471, %v469
        %v473 = vpop.permute.xlu0 %472
        %v475 = vadd.f32 %v447, %v473
        %v476 = vadd.f32 %v467, %v473
        %v479 = vrot.slane %v476, 4
        %v480 = vsel %vm321, %v475, %v479
        %482 = vst [vmem:[%s302] sm:$0xff] %v480
        %s483 = sand.u32 %s179, 1
        %s484 = scalar_lea.sflag [#allocation4], %s483
        %s485 = sand.u32 %s179, 1
        %s486 = smul.addr %s485, 8
        %s487 = scalar_lea.vmem [#allocation7], %s486
        // Predicated region
        $region53: #{tpu_custom_call.1} parent=43 // pred_check
          %p488 = pneg %p189
        $region54: #{tpu_custom_call.1} parent=43 // pred_check_branch
          %490 = sbr.rel (%p488) target = $region56
        $region55: #{tpu_custom_call.1} parent=43 // pred_region
          %s491 = smul.u32 2, %s29
          %493 = vsyncadd %s484, 0
          %s494 = smul.addr %s28, 2
          %s495 = sadd.s32 %s491, %s494
          %s496 = smul.addr %s495, 4
          %s497 = scalar_lea.hbm %s6, %s496
          %s499 = sshll.u32 %s487, 4
          %s500 = int_to_ptr.vmem [resolvable:$true] %s499
          %s501 = sshll.u32 %s497, 4
          %s502 = int_to_ptr.hbm [resolvable:$true] %s501
          %504 = dma.vmem_to_hbm [thread:$0]  %s500, 128, %s502, %s484
        $region56: #{tpu_custom_call.1} parent=43 // pred_fallthru
          _
      $region44: #{tpu_custom_call.1} parent=5 // pred_fallthru
        _
      %p505 = scmp.le.s32.totalorder 2, %s19
      // Predicated region
      $region57: #{tpu_custom_call.1} parent=5 // pred_check
        %p506 = pneg %p505
      $region58: #{tpu_custom_call.1} parent=5 // pred_check_branch
        %508 = sbr.rel (%p506) target = $region60
      $region59: #{tpu_custom_call.1} parent=5 // pred_region
        %s509 = ssub.s32 %s19, 2
        // Predicated region
        $region61: #{tpu_custom_call.1} parent=59 // pred_check
          %p510 = pneg %p195
        $region62: #{tpu_custom_call.1} parent=59 // pred_check_branch
          %512 = sbr.rel (%p510) target = $region64
        $region63: #{tpu_custom_call.1} parent=59 // pred_region
          %s513 = sand.u32 %s180, 1
          %s514 = scalar_lea.sflag [#allocation4], %s513
          %s515 = sand.u32 %s180, 1
          %s516 = smul.addr %s515, 8
          %s517 = scalar_lea.vmem [#allocation7], %s516
          %519 = dma.done %s514, 128
        $region64: #{tpu_custom_call.1} parent=59 // pred_fallthru
          _
      $region60: #{tpu_custom_call.1} parent=5 // pred_fallthru
        _
    $region6: #{tpu_custom_call.1} parent=1 // loop_footer
      %s23 = sadd.s32 1, %s19
    $region7: #{tpu_custom_call.1} parent=1 // loop_footer_branch
      %18 = sbr.rel target = $region3
    $region8: #{tpu_custom_call.1} parent=1 // loop_exit
      _
    %520 = vsyncpa [#allocation3], 1
    %s521 = scalar_lea.sflag [#allocation3], 1
    %522 = vsyncpa %s521, 1
    %523 = vsyncpa [#allocation6], 1
    %524 = vsyncpa [#allocation4], 1
    %s525 = scalar_lea.sflag [#allocation4], 1
    %526 = vsyncpa %s525, 1

</llo_original>
